<compile_context>
chip_gen: v5e
topology: v5e:2x2
jax: 0.10.0
libtpu: 0.0.40
codegen_flags: <defaults>
</compile_context>

<pallas_src>
import math
from functools import partial

import jax
import jax.numpy as jnp
from jax.experimental import pallas as pl
from jax.experimental.pallas import tpu as pltpu

HIDDEN = 3  # fixed by the module definition


def _mlp_packed_kernel(xp_ref, w1p_ref, b1p_ref, w2p_ref, b2p_ref, op_ref):
    """One batch tile in packed row-major layout (P batch elements per 128-lane row).

    xp_ref  : (tile_r, P*Din)    packed x tile (free reshape of x rows)
    w1p_ref : (P*Din, P*3)       kron(I_P, W1^T)   -- block-diagonal hidden weight
    b1p_ref : (1, P*3)           tiled hidden bias
    w2p_ref : (P*3, P*Dout)      kron(I_P, W2^T)   -- block-diagonal predict weight
    b2p_ref : (1, P*Dout)        tiled predict bias
    op_ref  : (tile_r, P*Dout)   packed output tile
    """
    xp = xp_ref[...]
    h = jnp.dot(xp, w1p_ref[...], preferred_element_type=jnp.float32)   # MXU, K = P*Din
    h = jnp.maximum(h + b1p_ref[...], 0.0)                              # bias + ReLU (VPU)
    out = jnp.dot(h, w2p_ref[...], preferred_element_type=jnp.float32)  # MXU, K = P*3
    op_ref[...] = (out + b2p_ref[...]).astype(op_ref.dtype)


def _pack_factor(d_in):
    # Smallest P (>= 8) such that P*d_in is a multiple of 128, so packed x rows are
    # lane-dense in VMEM.  For the canonical Din=16 this gives P=8 -> lane width 128.
    return max(8, 128 // math.gcd(128, d_in))


@partial(jax.jit, static_argnames=("tile_rows",))
def net_forward(x, w1, b1, w2, b2, *, tile_rows=4096):
    """Forward pass of Net. x: (B, Din) -> (B, Dout). Weights in PyTorch [out, in] layout."""
    batch, d_in = x.shape
    d_out, hid = w2.shape
    assert w1.shape == (hid, d_in) and b1.shape == (hid,) and b2.shape == (d_out,)

    p = _pack_factor(d_in)

    # Pad batch only to a multiple of the small pack factor (never to the tile size).
    # This is the only potential extra copy of x and only triggers when batch % p != 0.
    rem = (-batch) % p
    if rem:
        x = jnp.pad(x, ((0, rem), (0, 0)))
    rows = (batch + rem) // p

    # Free row-major reshape: P consecutive batch elements share one 128-lane row.
    xp = jnp.reshape(x, (rows, p * d_in))

    # Packed (block-diagonal) weights / tiled biases — tiny, built once per call.
    eye = jnp.eye(p, dtype=w1.dtype)
    w1p = jnp.kron(eye, w1.T)                       # (p*Din, p*hid)
    w2p = jnp.kron(eye, w2.T)                       # (p*hid, p*Dout)
    b1p = jnp.tile(b1, p).reshape(1, p * hid)
    b2p = jnp.tile(b2, p).reshape(1, p * d_out)

    # Tile the packed rows.  Big tiles amortize the per-grid-step overhead; keep >= 2
    # grid steps once the batch is non-trivial so both v7x TensorCores get work.
    tile_rows = max(8, (int(tile_rows) // 8) * 8)
    if rows < 16:
        tile_r = rows                                                   # single full block
    else:
        tile_r = min(tile_rows, ((pl.cdiv(rows, 2) + 7) // 8) * 8)
    grid = (pl.cdiv(rows, tile_r),)                                     # ragged last block OK
    const = lambda i: (0, 0)

    out_p = pl.pallas_call(
        _mlp_packed_kernel,
        out_shape=jax.ShapeDtypeStruct((rows, p * d_out), x.dtype),
        grid=grid,
        in_specs=[
            pl.BlockSpec((tile_r, p * d_in), lambda i: (i, 0)),   # x tile (double-buffered)
            pl.BlockSpec((p * d_in, p * hid), const),             # packed W1 (VMEM-resident)
            pl.BlockSpec((1, p * hid), const),                    # packed b1
            pl.BlockSpec((p * hid, p * d_out), const),            # packed W2
            pl.BlockSpec((1, p * d_out), const),                  # packed b2
        ],
        out_specs=pl.BlockSpec((tile_r, p * d_out), lambda i: (i, 0)),
        compiler_params=pltpu.CompilerParams(
            dimension_semantics=("parallel",),       # shard batch tiles across TCs (v7x)
            vmem_limit_bytes=32 * 1024 * 1024,       # above v5e's 16MiB scoped default
        ),
    )(xp, w1p, b1p, w2p, b2p)

    # Free reshape back to (padded_B, Dout); drop pad rows if any.
    out = jnp.reshape(out_p, (rows * p, d_out))
    return out[:batch] if rem else out


def init_params(key, input_channel, output_channel, hidden=HIDDEN):
    """torch.nn.Linear-style init: U(-1/sqrt(fan_in), 1/sqrt(fan_in)), PyTorch layouts."""
    k1, k2, k3, k4 = jax.random.split(key, 4)
    bound1 = 1.0 / math.sqrt(input_channel)
    bound2 = 1.0 / math.sqrt(hidden)
    w1 = jax.random.uniform(k1, (hidden, input_channel), jnp.float32, -bound1, bound1)
    b1 = jax.random.uniform(k2, (hidden,), jnp.float32, -bound1, bound1)
    w2 = jax.random.uniform(k3, (output_channel, hidden), jnp.float32, -bound2, bound2)
    b2 = jax.random.uniform(k4, (output_channel,), jnp.float32, -bound2, bound2)
    return w1, b1, w2, b2


def reference_forward(x, w1, b1, w2, b2):
    """Pure-JAX reference (exactly the PyTorch math: x @ W^T + b)."""
    h = jnp.maximum(x @ w1.T + b1, 0.0)
    return h @ w2.T + b2


if __name__ == "__main__":
    key = jax.random.PRNGKey(0)
    kp, kx1, kx2 = jax.random.split(key, 3)

    input_channel = 16
    output_channel = 4
    w1, b1, w2, b2 = init_params(kp, input_channel, output_channel)

    # Tolerance covers TPU default matmul precision (bf16 passes) in the XLA reference.
    TOL = 1e-2

    # Small batch: exercises the pad-to-pack-factor + single-block path.
    x = jax.random.normal(kx1, (10, input_channel), jnp.float32)
    out = jax.block_until_ready(net_forward(x, w1, b1, w2, b2))
    ref = reference_forward(x, w1, b1, w2, b2)
    assert out.shape == (10, output_channel)
    assert jnp.allclose(out, ref, atol=TOL, rtol=TOL), "small-batch mismatch vs reference"

    # Multi-tile batch: exercises the grid, the parallel split, and a ragged last tile.
    x2 = jax.random.normal(kx2, (4000, input_channel), jnp.float32)
    out2 = jax.block_until_ready(net_forward(x2, w1, b1, w2, b2, tile_rows=64))
    ref2 = reference_forward(x2, w1, b1, w2, b2)
    assert out2.shape == (4000, output_channel)
    assert jnp.allclose(out2, ref2, atol=TOL, rtol=TOL), "tiled-batch mismatch vs reference"

    print("KERNEL_OK")
</pallas_src>

<mosaic_0001>
module attributes {stable_mosaic.version = 11 : i64} {
  func.func @_mlp_packed_kernel(%arg0: i32, %arg1: memref<2x128xf32, #tpu.memory_space<vmem>>, %arg2: memref<128x24xf32, #tpu.memory_space<vmem>>, %arg3: memref<1x24xf32, #tpu.memory_space<vmem>>, %arg4: memref<24x32xf32, #tpu.memory_space<vmem>>, %arg5: memref<1x32xf32, #tpu.memory_space<vmem>>, %arg6: memref<2x32xf32, #tpu.memory_space<vmem>>) attributes {dimension_semantics = [#tpu.dimension_semantics<parallel>], iteration_bounds = array<i64: 1>, scalar_prefetch = 0 : i64, scratch_operands = 0 : i64, tpu.core_type = #tpu.core_type<tc>, window_params = [{transform_indices = @transform_0, window_bounds = array<i64: 2, 128>}, {pipeline_mode = #tpu.pipeline_mode<synchronous>, transform_indices = @transform_1, window_bounds = array<i64: 128, 24>}, {pipeline_mode = #tpu.pipeline_mode<synchronous>, transform_indices = @transform_2, window_bounds = array<i64: 1, 24>}, {pipeline_mode = #tpu.pipeline_mode<synchronous>, transform_indices = @transform_3, window_bounds = array<i64: 24, 32>}, {pipeline_mode = #tpu.pipeline_mode<synchronous>, transform_indices = @transform_4, window_bounds = array<i64: 1, 32>}, {transform_indices = @transform_5, window_bounds = array<i64: 2, 32>}]} {
    %c0 = arith.constant 0 : index
    %c0_0 = arith.constant 0 : index
    %0 = vector.load %arg1[%c0, %c0_0] : memref<2x128xf32, #tpu.memory_space<vmem>>, vector<2x128xf32>
    %c0_1 = arith.constant 0 : index
    %c0_2 = arith.constant 0 : index
    %1 = vector.load %arg2[%c0_1, %c0_2] : memref<128x24xf32, #tpu.memory_space<vmem>>, vector<128x24xf32>
    %cst = arith.constant dense<0.000000e+00> : vector<2x24xf32>
    %2 = tpu.matmul %0, %1, %cst {dimension_numbers = #tpu.dot_dimension_numbers<[1], [0], [0], [1], [0, 0, 1, 1], [], []>} : vector<2x128xf32>, vector<128x24xf32>, vector<2x24xf32> -> vector<2x24xf32>
    %c0_3 = arith.constant 0 : index
    %c0_4 = arith.constant 0 : index
    %3 = vector.load %arg3[%c0_3, %c0_4] : memref<1x24xf32, #tpu.memory_space<vmem>>, vector<1x24xf32>
    %4 = vector.broadcast %3 : vector<1x24xf32> to vector<2x24xf32>
    %5 = arith.addf %2, %4 : vector<2x24xf32>
    %cst_5 = arith.constant 0.000000e+00 : f32
    %6 = vector.broadcast %cst_5 : f32 to vector<2x24xf32>
    %7 = arith.maximumf %5, %6 : vector<2x24xf32>
    %c0_6 = arith.constant 0 : index
    %c0_7 = arith.constant 0 : index
    %8 = vector.load %arg4[%c0_6, %c0_7] : memref<24x32xf32, #tpu.memory_space<vmem>>, vector<24x32xf32>
    %cst_8 = arith.constant dense<0.000000e+00> : vector<2x32xf32>
    %9 = tpu.matmul %7, %8, %cst_8 {dimension_numbers = #tpu.dot_dimension_numbers<[1], [0], [0], [1], [0, 0, 1, 1], [], []>} : vector<2x24xf32>, vector<24x32xf32>, vector<2x32xf32> -> vector<2x32xf32>
    %c0_9 = arith.constant 0 : index
    %c0_10 = arith.constant 0 : index
    %10 = vector.load %arg5[%c0_9, %c0_10] : memref<1x32xf32, #tpu.memory_space<vmem>>, vector<1x32xf32>
    %11 = vector.broadcast %10 : vector<1x32xf32> to vector<2x32xf32>
    %12 = arith.addf %9, %11 : vector<2x32xf32>
    %c0_11 = arith.constant 0 : index
    %c0_12 = arith.constant 0 : index
    %13 = vector.load %arg6[%c0_11, %c0_12] : memref<2x32xf32, #tpu.memory_space<vmem>>, vector<2x32xf32>
    tpu.vector_store %arg6[%c0_11, %c0_12], %12 {strides = array<i32>} : memref<2x32xf32, #tpu.memory_space<vmem>>, vector<2x32xf32>,
    return
  }
  func.func @transform_0(%arg0: i32) -> (i32, i32) {
    %c0_i32 = arith.constant 0 : i32
    %c0_i32_0 = arith.constant 0 : i32
    return %arg0, %c0_i32 : i32, i32
  }
  func.func @transform_1(%arg0: i32) -> (i32, i32) {
    %c0_i32 = arith.constant 0 : i32
    %c0_i32_0 = arith.constant 0 : i32
    %c0_i32_1 = arith.constant 0 : i32
    return %c0_i32, %c0_i32_0 : i32, i32
  }
  func.func @transform_2(%arg0: i32) -> (i32, i32) {
    %c0_i32 = arith.constant 0 : i32
    %c0_i32_0 = arith.constant 0 : i32
    %c0_i32_1 = arith.constant 0 : i32
    return %c0_i32, %c0_i32_0 : i32, i32
  }
  func.func @transform_3(%arg0: i32) -> (i32, i32) {
    %c0_i32 = arith.constant 0 : i32
    %c0_i32_0 = arith.constant 0 : i32
    %c0_i32_1 = arith.constant 0 : i32
    return %c0_i32, %c0_i32_0 : i32, i32
  }
  func.func @transform_4(%arg0: i32) -> (i32, i32) {
    %c0_i32 = arith.constant 0 : i32
    %c0_i32_0 = arith.constant 0 : i32
    %c0_i32_1 = arith.constant 0 : i32
    return %c0_i32, %c0_i32_0 : i32, i32
  }
  func.func @transform_5(%arg0: i32) -> (i32, i32) {
    %c0_i32 = arith.constant 0 : i32
    %c0_i32_0 = arith.constant 0 : i32
    return %arg0, %c0_i32 : i32, i32
  }
}

</mosaic_0001>

<llo_original>
// kernel: tile.13
$region0: #{tile.13}
  #allocation0 [shape = 's32[1]{0}', space=sflag, size = 0x4, scoped, tag = 'scoped memory for tile.13']
  %s0 = inlined_call_operand.vmem [shape: f32[3], index: 0, kind: input, shape index: {}]
  %s1 = inlined_call_operand.vmem [shape: f32[8,3], index: 1, kind: output, shape index: {}]
  // Predicated region
  $region2: #{tile.13} parent=0 // pred_check
    _
  $region3: #{tile.13} parent=0 // pred_check_branch
    %3 = sbr.rel (0) target = $region5
  $region4: #{tile.13} parent=0 // pred_region
    _
  $region5: #{tile.13} parent=0 // pred_fallthru
    _
  %v4 = vld [vmem:[%s0] ss:$0 sm:$0xff]
  %5 = vst [vmem:[%s1] sm:$0xff] %v4

// kernel: tile.18
$region0: #{tile.18}
  #allocation0 [shape = 's32[1]{0}', space=sflag, size = 0x4, scoped, tag = 'scoped memory for tile.18']
  %s0 = inlined_call_operand.vmem [shape: f32[4], index: 0, kind: input, shape index: {}]
  %s1 = inlined_call_operand.vmem [shape: f32[8,4], index: 1, kind: output, shape index: {}]
  // Predicated region
  $region2: #{tile.18} parent=0 // pred_check
    _
  $region3: #{tile.18} parent=0 // pred_check_branch
    %3 = sbr.rel (0) target = $region5
  $region4: #{tile.18} parent=0 // pred_region
    _
  $region5: #{tile.18} parent=0 // pred_fallthru
    _
  %v4 = vld [vmem:[%s0] ss:$0 sm:$0xff]
  %5 = vst [vmem:[%s1] sm:$0xff] %v4

// kernel: tile.14
$region0: #{tile.14}
  %s0 = inlined_call_operand.vmem [shape: f32[8,3], index: 0, kind: input, shape index: {}]
  %s1 = inlined_call_operand.vmem [shape: f32[1,24], index: 1, kind: output, shape index: {}]
  $region1: #{tile.14} parent=0
    #allocation0 [shape = 'u8[4096]{0}', space=vmem, size = 0x1000, scoped, tag = 'scoped mem for output reshape']
    %v2 = vld [vmem:[%s0] sm:$0x1]
    %vm3 = vcmask 23552
    %4 = vst.msk [vmem:[#allocation0] sm:$0x1] %vm3, %v2
    %s5 = scalar_lea.vmem %s0, 7
    %v6 = vld [vmem:[%s5] sm:$0x1]
    %7 = vrot.lane.b32.xlu0 %v6, 21
    %v8 = vpop.permute.xlu0 %7
    %vm9 = vcmask 195752
    %10 = vst.msk [vmem:[#allocation0] sm:$0x1] %vm9, %v8
    %s11 = scalar_lea.vmem %s0, 6
    %v12 = vld [vmem:[%s11] sm:$0x1]
    %13 = vrot.lane.b32.xlu0 %v12, 18
    %v14 = vpop.permute.xlu0 %13
    %vm15 = vcmask 171152
    %16 = vst.msk [vmem:[#allocation0] sm:$0x1] %vm15, %v14
    %s17 = scalar_lea.vmem %s0, 5
    %v18 = vld [vmem:[%s17] sm:$0x1]
    %19 = vrot.lane.b32.xlu0 %v18, 15
    %v20 = vpop.permute.xlu0 %19
    %vm21 = vcmask 146552
    %22 = vst.msk [vmem:[#allocation0] sm:$0x1] %vm21, %v20
    %s23 = scalar_lea.vmem %s0, 4
    %v24 = vld [vmem:[%s23] sm:$0x1]
    %25 = vrot.lane.b32.xlu0 %v24, 12
    %v26 = vpop.permute.xlu0 %25
    %vm27 = vcmask 121952
    %28 = vst.msk [vmem:[#allocation0] sm:$0x1] %vm27, %v26
    %s29 = scalar_lea.vmem %s0, 3
    %v30 = vld [vmem:[%s29] sm:$0x1]
    %31 = vrot.lane.b32.xlu0 %v30, 9
    %v32 = vpop.permute.xlu0 %31
    %vm33 = vcmask 97352
    %34 = vst.msk [vmem:[#allocation0] sm:$0x1] %vm33, %v32
    %s35 = scalar_lea.vmem %s0, 2
    %v36 = vld [vmem:[%s35] sm:$0x1]
    %37 = vrot.lane.b32.xlu0 %v36, 6
    %v38 = vpop.permute.xlu0 %37
    %vm39 = vcmask 72752
    %40 = vst.msk [vmem:[#allocation0] sm:$0x1] %vm39, %v38
    %s41 = scalar_lea.vmem %s0, 1
    %v42 = vld [vmem:[%s41] sm:$0x1]
    %43 = vrot.lane.b32.xlu0 %v42, 3
    %v44 = vpop.permute.xlu0 %43
    %vm45 = vcmask 48152
    %46 = vst.msk [vmem:[#allocation0] sm:$0x1] %vm45, %v44
    %s48 = ssub.s32 2, 1
    %v49 = vld [vmem:[#allocation0] sm:%s48]
    %s51 = ssub.s32 2, 1
    %52 = vst [vmem:[%s1] sm:%s51] %v49

// kernel: tile.19
$region0: #{tile.19}
  %s0 = inlined_call_operand.vmem [shape: f32[8,4], index: 0, kind: input, shape index: {}]
  %s1 = inlined_call_operand.vmem [shape: f32[1,32], index: 1, kind: output, shape index: {}]
  $region1: #{tile.19} parent=0
    #allocation0 [shape = 'u8[4096]{0}', space=vmem, size = 0x1000, scoped, tag = 'scoped mem for output reshape']
    %v2 = vld [vmem:[%s0] sm:$0x1]
    %vm3 = vcmask 31744
    %4 = vst.msk [vmem:[#allocation0] sm:$0x1] %vm3, %v2
    %s5 = scalar_lea.vmem %s0, 7
    %v6 = vld [vmem:[%s5] sm:$0x1]
    %7 = vrot.lane.b32.xlu0 %v6, 28
    %v8 = vpop.permute.xlu0 %7
    %vm9 = vcmask 261344
    %10 = vst.msk [vmem:[#allocation0] sm:$0x1] %vm9, %v8
    %s11 = scalar_lea.vmem %s0, 6
    %v12 = vld [vmem:[%s11] sm:$0x1]
    %13 = vrot.lane.b32.xlu0 %v12, 24
    %v14 = vpop.permute.xlu0 %13
    %vm15 = vcmask 228544
    %16 = vst.msk [vmem:[#allocation0] sm:$0x1] %vm15, %v14
    %s17 = scalar_lea.vmem %s0, 5
    %v18 = vld [vmem:[%s17] sm:$0x1]
    %19 = vrot.lane.b32.xlu0 %v18, 20
    %v20 = vpop.permute.xlu0 %19
    %vm21 = vcmask 195744
    %22 = vst.msk [vmem:[#allocation0] sm:$0x1] %vm21, %v20
    %s23 = scalar_lea.vmem %s0, 4
    %v24 = vld [vmem:[%s23] sm:$0x1]
    %25 = vrot.lane.b32.xlu0 %v24, 16
    %v26 = vpop.permute.xlu0 %25
    %vm27 = vcmask 162944
    %28 = vst.msk [vmem:[#allocation0] sm:$0x1] %vm27, %v26
    %s29 = scalar_lea.vmem %s0, 3
    %v30 = vld [vmem:[%s29] sm:$0x1]
    %31 = vrot.lane.b32.xlu0 %v30, 12
    %v32 = vpop.permute.xlu0 %31
    %vm33 = vcmask 130144
    %34 = vst.msk [vmem:[#allocation0] sm:$0x1] %vm33, %v32
    %s35 = scalar_lea.vmem %s0, 2
    %v36 = vld [vmem:[%s35] sm:$0x1]
    %37 = vrot.lane.b32.xlu0 %v36, 8
    %v38 = vpop.permute.xlu0 %37
    %vm39 = vcmask 97344
    %40 = vst.msk [vmem:[#allocation0] sm:$0x1] %vm39, %v38
    %s41 = scalar_lea.vmem %s0, 1
    %v42 = vld [vmem:[%s41] sm:$0x1]
    %43 = vrot.lane.b32.xlu0 %v42, 4
    %v44 = vpop.permute.xlu0 %43
    %vm45 = vcmask 64544
    %46 = vst.msk [vmem:[#allocation0] sm:$0x1] %vm45, %v44
    %s48 = ssub.s32 2, 1
    %v49 = vld [vmem:[#allocation0] sm:%s48]
    %s51 = ssub.s32 2, 1
    %52 = vst [vmem:[%s1] sm:%s51] %v49

// kernel: net_forward.1
$region0: #{net_forward.1}
  #allocation0 [shape = 'u32[]', space=smem, size = 0x4, offset = 0x4, fixed_abs, tag = 'smem constant byte address 0x4 - core index']
  #allocation1 [shape = 'u32[72,128]{1,0:T(1,128)}', space=vmem, size = 0x9000, scoped, tag = 'internal scratch']
  %s0 = inlined_call_operand.vmem [shape: f32[2,128], index: 0, kind: input, shape index: {}]
  %s1 = inlined_call_operand.vmem [shape: f32[128,24], index: 1, kind: input, shape index: {}]
  %s2 = inlined_call_operand.vmem [shape: f32[1,24], index: 2, kind: input, shape index: {}]
  %s3 = inlined_call_operand.vmem [shape: f32[24,32], index: 3, kind: input, shape index: {}]
  %s4 = inlined_call_operand.vmem [shape: f32[1,32], index: 4, kind: input, shape index: {}]
  %s5 = inlined_call_operand.vmem [shape: f32[2,32], index: 5, kind: output, shape index: {}]
  %s6 = sld [smem:[#allocation0]]
  $region30: #{net_forward.1} parent=0
    _
  %s8 = ssub.s32 1, %s6
  %s9 = scalar_select 0, %s8, %s6
  // Predicated region
  $region2: #{net_forward.1} parent=0 // pred_check
    _
  $region3: #{net_forward.1} parent=0 // pred_check_branch
    %11 = sbr.rel (0) target = $region5
  $region4: #{net_forward.1} parent=0 // pred_region
    _
  $region5: #{net_forward.1} parent=0 // pred_fallthru
    _
  // Predicated region
  $region6: #{net_forward.1} parent=0 // pred_check
    _
  $region7: #{net_forward.1} parent=0 // pred_check_branch
    %13 = sbr.rel (0) target = $region9
  $region8: #{net_forward.1} parent=0 // pred_region
    _
  $region9: #{net_forward.1} parent=0 // pred_fallthru
    _
  // Predicated region
  $region10: #{net_forward.1} parent=0 // pred_check
    _
  $region11: #{net_forward.1} parent=0 // pred_check_branch
    %15 = sbr.rel (0) target = $region13
  $region12: #{net_forward.1} parent=0 // pred_region
    _
  $region13: #{net_forward.1} parent=0 // pred_fallthru
    _
  // Predicated region
  $region14: #{net_forward.1} parent=0 // pred_check
    _
  $region15: #{net_forward.1} parent=0 // pred_check_branch
    %17 = sbr.rel (0) target = $region17
  $region16: #{net_forward.1} parent=0 // pred_region
    _
  $region17: #{net_forward.1} parent=0 // pred_fallthru
    _
  // Predicated region
  $region18: #{net_forward.1} parent=0 // pred_check
    _
  $region19: #{net_forward.1} parent=0 // pred_check_branch
    %19 = sbr.rel (0) target = $region21
  $region20: #{net_forward.1} parent=0 // pred_region
    _
  $region21: #{net_forward.1} parent=0 // pred_fallthru
    _
  %v20 = vld [vmem:[%s0] sm:$0x3]
  %v21 = vld [vmem:[%s1] sm:$0xff]
  %v22 = vld [vmem:[%s1 + $0x8] sm:$0xff]
  %v23 = vld [vmem:[%s1 + $0x10] sm:$0xff]
  %v24 = vld [vmem:[%s1 + $0x18] sm:$0xff]
  %v25 = vld [vmem:[%s1 + $0x20] sm:$0xff]
  %v26 = vld [vmem:[%s1 + $0x28] sm:$0xff]
  %v27 = vld [vmem:[%s1 + $0x30] sm:$0xff]
  %v28 = vld [vmem:[%s1 + $0x38] sm:$0xff]
  %v29 = vld [vmem:[%s1 + $0x40] sm:$0xff]
  %v30 = vld [vmem:[%s1 + $0x48] sm:$0xff]
  %v31 = vld [vmem:[%s1 + $0x50] sm:$0xff]
  %v32 = vld [vmem:[%s1 + $0x58] sm:$0xff]
  %v33 = vld [vmem:[%s1 + $0x60] sm:$0xff]
  %v34 = vld [vmem:[%s1 + $0x68] sm:$0xff]
  %v35 = vld [vmem:[%s1 + $0x70] sm:$0xff]
  %v36 = vld [vmem:[%s1 + $0x78] sm:$0xff]
  %v37 = vld [vmem:[%s2] sm:$0x1]
  %v39 = vperm.slane %v37, 0
  %41 = vmatpush.msra.mxu0 %v36
  %42 = vmatpush.msra.mxu0 %v35
  %43 = vmatpush.msra.mxu0 %v34
  %44 = vmatpush.msra.mxu0 %v33
  %45 = vmatpush.msra.mxu0 %v32
  %46 = vmatpush.msra.mxu0 %v31
  %47 = vmatpush.msra.mxu0 %v30
  %48 = vmatpush.msra.mxu0 %v29
  %49 = vmatpush.msra.mxu0 %v28
  %50 = vmatpush.msra.mxu0 %v27
  %51 = vmatpush.msra.mxu0 %v26
  %52 = vmatpush.msra.mxu0 %v25
  %53 = vmatpush.msra.mxu0 %v24
  %54 = vmatpush.msra.mxu0 %v23
  %55 = vmatpush.msra.mxu0 %v22
  %56 = vmatpush.msra.mxu0 %v21
  %57 = vmatmul.f32.gmra.mxu0 %v20
  %v58 = vpop.f32.mrf.mxu0
  %v59 = vadd.f32 %v39, %v58
  %60 = vdwg.mxu0
  %v61 = vmax.f32 %v59, 0.0
  %v62 = vld [vmem:[%s3] sm:$0xff]
  %v63 = vld [vmem:[%s3 + $0x8] sm:$0xff]
  %v64 = vld [vmem:[%s3 + $0x10] sm:$0xff]
  %v65 = vld [vmem:[%s4] sm:$0x1]
  %v67 = vperm.slane %v65, 0
  %vm69 = vcmask 195584
  %v71 = vsel %vm69, %v61, 0
  %73 = vmatpush.msra.mxu0 0.0
  %74 = vmatpush.msra.mxu0 0.0
  %75 = vmatpush.msra.mxu0 0.0
  %76 = vmatpush.msra.mxu0 0.0
  %77 = vmatpush.msra.mxu0 0.0
  %78 = vmatpush.msra.mxu0 0.0
  %79 = vmatpush.msra.mxu0 0.0
  %80 = vmatpush.msra.mxu0 0.0
  %81 = vmatpush.msra.mxu0 0.0
  %82 = vmatpush.msra.mxu0 0.0
  %83 = vmatpush.msra.mxu0 0.0
  %84 = vmatpush.msra.mxu0 0.0
  %85 = vmatpush.msra.mxu0 0.0
  %86 = vmatpush.msra.mxu0 %v64
  %87 = vmatpush.msra.mxu0 %v63
  %88 = vmatpush.msra.mxu0 %v62
  %89 = vmatmul.f32.gmra.mxu0 %v71
  %v90 = vpop.f32.mrf.mxu0
  %v91 = vadd.f32 %v67, %v90
  %92 = vdwg.mxu0
  %vm93 = vcmask 254976
  %94 = vst.msk [vmem:[%s5] sm:$0x3] %vm93, %v91
  // Predicated region
  $region22: #{net_forward.1} parent=0 // pred_check
    _
  $region23: #{net_forward.1} parent=0 // pred_check_branch
    %96 = sbr.rel (0) target = $region25
  $region24: #{net_forward.1} parent=0 // pred_region
    _
  $region25: #{net_forward.1} parent=0 // pred_fallthru
    _
  // Predicated region
  $region26: #{net_forward.1} parent=0 // pred_check
    _
  $region27: #{net_forward.1} parent=0 // pred_check_branch
    %98 = sbr.rel (0) target = $region29
  $region28: #{net_forward.1} parent=0 // pred_region
    _
  $region29: #{net_forward.1} parent=0 // pred_fallthru
    _

</llo_original>
